<compile_context>
chip_gen: v7x
topology: tpu7x:2x2x1
jax: 0.10.0
libtpu: 0.0.40
codegen_flags: <defaults>
</compile_context>

<pallas_src>
import jax
import jax.numpy as jnp
from jax.experimental import pallas as pl
from jax.experimental.pallas import tpu as pltpu

LANES = 128


def _align8(r):
    return ((r + 7) // 8) * 8


def pack_params(a_hat, params):
    """Fold layer3+mean+classifier and pack everything into one (rows,128) slab."""
    w1, b1, w2, b2, w3, b3, wc, bc = params
    in_feats, h = w1.shape
    c = wc.shape[1]
    n = a_hat.shape[0]

    # Folded constants.
    w3c = w3 @ wc                                   # (h, c)
    b_out = b3 @ wc + bc                            # (1, c)
    v = jnp.mean(a_hat, axis=0, keepdims=True)      # (1, n) == (1/N)*ones(1,N)@A_hat

    # 8-row-aligned offsets (lane offset is always 0 -> aligned slices in-kernel).
    r = 0
    r_w1 = r;   r += _align8(in_feats)
    r_b1 = r;   r += 8
    r_w2 = r;   r += _align8(h)
    r_b2 = r;   r += 8
    r_w3c = r;  r += _align8(h)
    r_bout = r; r += 8
    r_v = r;    r += _align8((n + LANES - 1) // LANES * 1) * 0 + 8  # 1 row used
    total = r

    slab = jnp.zeros((total, LANES), jnp.float32)
    slab = slab.at[r_w1:r_w1 + in_feats, :h].set(w1)
    slab = slab.at[r_b1:r_b1 + 1, :h].set(b1)
    slab = slab.at[r_w2:r_w2 + h, :h].set(w2)
    slab = slab.at[r_b2:r_b2 + 1, :h].set(b2)
    slab = slab.at[r_w3c:r_w3c + h, :c].set(w3c)    # zero-padded to 128 lanes
    slab = slab.at[r_bout:r_bout + 1, :c].set(b_out)
    slab = slab.at[r_v:r_v + 1, :n].set(v)

    offsets = dict(w1=r_w1, b1=r_b1, w2=r_w2, b2=r_b2,
                   w3c=r_w3c, bout=r_bout, v=r_v)
    return slab, offsets


def gcn3_forward(a_hat, x, params):
    n, in_feats = x.shape
    w1 = params[0]
    h_feats = w1.shape[1]
    num_classes = params[6].shape[1]

    slab, off = pack_params(a_hat, params)
    r_w1, r_b1, r_w2, r_b2 = off["w1"], off["b1"], off["w2"], off["b2"]
    r_w3c, r_bout, r_v = off["w3c"], off["bout"], off["v"]
    aggregate_first = in_feats <= h_feats           # DGL contraction-order heuristic

    def kernel(a_ref, x_ref, p_ref, out_ref):
        a = a_ref[...]                              # (N, N) normalized adjacency
        xv = x_ref[...]                             # (N, F)

        # --- GraphConv 1 + ReLU ---
        w1v = p_ref[r_w1:r_w1 + in_feats, :h_feats]
        b1v = p_ref[r_b1:r_b1 + 1, :h_feats]
        if aggregate_first:                         # (A @ X) @ W1  (F < H)
            ax = jnp.dot(a, xv, preferred_element_type=jnp.float32)
            h1 = jnp.dot(ax, w1v, preferred_element_type=jnp.float32)
        else:                                       # A @ (X @ W1)
            xw = jnp.dot(xv, w1v, preferred_element_type=jnp.float32)
            h1 = jnp.dot(a, xw, preferred_element_type=jnp.float32)
        h1 = jnp.maximum(h1 + b1v, 0.0)

        # --- GraphConv 2 + ReLU ---
        w2v = p_ref[r_w2:r_w2 + h_feats, :h_feats]
        b2v = p_ref[r_b2:r_b2 + 1, :h_feats]
        hw = jnp.dot(h1, w2v, preferred_element_type=jnp.float32)
        h2 = jnp.maximum(jnp.dot(a, hw, preferred_element_type=jnp.float32) + b2v, 0.0)

        # --- Folded GraphConv 3 + mean_nodes + classifier ---
        vv = p_ref[r_v:r_v + 1, :n]                 # (1, N)
        vh = jnp.dot(vv, h2, preferred_element_type=jnp.float32)     # (1, H)
        w3cv = p_ref[r_w3c:r_w3c + h_feats, :]      # (H, 128) zero-padded
        boutv = p_ref[r_bout:r_bout + 1, :]         # (1, 128) zero-padded
        out_ref[...] = jnp.dot(vh, w3cv, preferred_element_type=jnp.float32) + boutv

    flops = int(2 * (n * n * in_feats + n * in_feats * h_feats      # layer 1
                     + n * h_feats * h_feats + n * n * h_feats      # layer 2
                     + n * h_feats + h_feats * LANES))              # folded tail
    bytes_accessed = int(4 * (n * n + n * in_feats + slab.size + LANES))

    vmem = pl.BlockSpec(memory_space=pltpu.MemorySpace.VMEM)
    out_padded = pl.pallas_call(
        kernel,
        out_shape=jax.ShapeDtypeStruct((1, LANES), jnp.float32),
        in_specs=[vmem, vmem, vmem],
        out_specs=vmem,
        cost_estimate=pl.CostEstimate(flops=flops, transcendentals=0,
                                      bytes_accessed=bytes_accessed),
    )(a_hat, x, slab)
    return out_padded[:, :num_classes]


def reference_forward(a_hat, x, params):
    """Pure-JAX reference (unfolded), mirrors the PyTorch/DGL forward."""
    (w1, b1, w2, b2, w3, b3, wc, bc) = params
    h = jnp.maximum(a_hat @ (x @ w1) + b1, 0.0)
    h = jnp.maximum(a_hat @ (h @ w2) + b2, 0.0)
    h = a_hat @ (h @ w3) + b3
    hg = jnp.mean(h, axis=0, keepdims=True)
    return hg @ wc + bc


def build_graph_and_params(key, n_nodes, in_feats, h_feats, num_classes):
    k_adj, k_x, k1, k2, k3, kc = jax.random.split(key, 6)

    # Deterministic random undirected graph + self-loops.
    upper = (jax.random.uniform(k_adj, (n_nodes, n_nodes)) < 0.25).astype(jnp.float32)
    adj = jnp.triu(upper, 1)
    adj = adj + adj.T + jnp.eye(n_nodes, dtype=jnp.float32)   # symmetric, self-loops

    # A_hat = D^{-1/2} A D^{-1/2}  (DGL GraphConv norm='both')
    deg = jnp.sum(adj, axis=1)
    d_inv_sqrt = 1.0 / jnp.sqrt(deg)
    a_hat = adj * d_inv_sqrt[:, None] * d_inv_sqrt[None, :]

    x = jax.random.normal(k_x, (n_nodes, in_feats), dtype=jnp.float32)

    def glorot(k, fan_in, fan_out):
        lim = (6.0 / (fan_in + fan_out)) ** 0.5
        return jax.random.uniform(k, (fan_in, fan_out), jnp.float32, -lim, lim)

    w1 = glorot(k1, in_feats, h_feats)
    b1 = jnp.zeros((1, h_feats), jnp.float32)
    w2 = glorot(k2, h_feats, h_feats)
    b2 = jnp.zeros((1, h_feats), jnp.float32)
    w3 = glorot(k3, h_feats, h_feats)
    b3 = jnp.zeros((1, h_feats), jnp.float32)
    wc = glorot(kc, h_feats, num_classes)
    bc = jnp.zeros((1, num_classes), jnp.float32)
    return a_hat, x, (w1, b1, w2, b2, w3, b3, wc, bc)


if __name__ == "__main__":
    N_NODES, IN_FEATS, H_FEATS, NUM_CLASSES = 32, 8, 32, 4

    key = jax.random.PRNGKey(0)
    a_hat, x, params = build_graph_and_params(key, N_NODES, IN_FEATS, H_FEATS, NUM_CLASSES)

    out = gcn3_forward(a_hat, x, params)
    out = jax.block_until_ready(out)

    ref = reference_forward(a_hat, x, params)
    assert out.shape == (1, NUM_CLASSES)
    assert jnp.allclose(out, ref, atol=1e-4, rtol=1e-4), (out, ref)

    print("KERNEL_OK")
</pallas_src>

<mosaic_0001>
module attributes {stable_mosaic.version = 11 : i64} {
  func.func @kernel(%arg0: memref<32x32xf32, #tpu.memory_space<vmem>>, %arg1: memref<32x8xf32, #tpu.memory_space<vmem>>, %arg2: memref<104x128xf32, #tpu.memory_space<vmem>>, %arg3: memref<1x128xf32, #tpu.memory_space<vmem>>) attributes {dimension_semantics = [], scalar_prefetch = 0 : i64, scratch_operands = 0 : i64, tpu.core_type = #tpu.core_type<tc>} {
    %c0 = arith.constant 0 : index
    %c0_0 = arith.constant 0 : index
    %0 = vector.load %arg0[%c0, %c0_0] : memref<32x32xf32, #tpu.memory_space<vmem>>, vector<32x32xf32>
    %c0_1 = arith.constant 0 : index
    %c0_2 = arith.constant 0 : index
    %1 = vector.load %arg1[%c0_1, %c0_2] : memref<32x8xf32, #tpu.memory_space<vmem>>, vector<32x8xf32>
    %c0_3 = arith.constant 0 : index
    %c0_4 = arith.constant 0 : index
    %2 = vector.load %arg2[%c0_3, %c0_4] : memref<104x128xf32, #tpu.memory_space<vmem>>, vector<8x32xf32>
    %c8 = arith.constant 8 : index
    %c0_5 = arith.constant 0 : index
    %3 = vector.load %arg2[%c8, %c0_5] : memref<104x128xf32, #tpu.memory_space<vmem>>, vector<1x32xf32>
    %cst = arith.constant dense<0.000000e+00> : vector<32x8xf32>
    %4 = tpu.matmul %0, %1, %cst {dimension_numbers = #tpu.dot_dimension_numbers<[1], [0], [0], [1], [0, 0, 1, 1], [], []>} : vector<32x32xf32>, vector<32x8xf32>, vector<32x8xf32> -> vector<32x8xf32>
    %cst_6 = arith.constant dense<0.000000e+00> : vector<32x32xf32>
    %5 = tpu.matmul %4, %2, %cst_6 {dimension_numbers = #tpu.dot_dimension_numbers<[1], [0], [0], [1], [0, 0, 1, 1], [], []>} : vector<32x8xf32>, vector<8x32xf32>, vector<32x32xf32> -> vector<32x32xf32>
    %6 = vector.broadcast %3 : vector<1x32xf32> to vector<32x32xf32>
    %7 = arith.addf %5, %6 : vector<32x32xf32>
    %cst_7 = arith.constant 0.000000e+00 : f32
    %8 = vector.broadcast %cst_7 : f32 to vector<32x32xf32>
    %9 = arith.maximumf %7, %8 : vector<32x32xf32>
    %c16 = arith.constant 16 : index
    %c0_8 = arith.constant 0 : index
    %10 = vector.load %arg2[%c16, %c0_8] : memref<104x128xf32, #tpu.memory_space<vmem>>, vector<32x32xf32>
    %c48 = arith.constant 48 : index
    %c0_9 = arith.constant 0 : index
    %11 = vector.load %arg2[%c48, %c0_9] : memref<104x128xf32, #tpu.memory_space<vmem>>, vector<1x32xf32>
    %cst_10 = arith.constant dense<0.000000e+00> : vector<32x32xf32>
    %12 = tpu.matmul %9, %10, %cst_10 {dimension_numbers = #tpu.dot_dimension_numbers<[1], [0], [0], [1], [0, 0, 1, 1], [], []>} : vector<32x32xf32>, vector<32x32xf32>, vector<32x32xf32> -> vector<32x32xf32>
    %cst_11 = arith.constant dense<0.000000e+00> : vector<32x32xf32>
    %13 = tpu.matmul %0, %12, %cst_11 {dimension_numbers = #tpu.dot_dimension_numbers<[1], [0], [0], [1], [0, 0, 1, 1], [], []>} : vector<32x32xf32>, vector<32x32xf32>, vector<32x32xf32> -> vector<32x32xf32>
    %14 = vector.broadcast %11 : vector<1x32xf32> to vector<32x32xf32>
    %15 = arith.addf %13, %14 : vector<32x32xf32>
    %cst_12 = arith.constant 0.000000e+00 : f32
    %16 = vector.broadcast %cst_12 : f32 to vector<32x32xf32>
    %17 = arith.maximumf %15, %16 : vector<32x32xf32>
    %c96 = arith.constant 96 : index
    %c0_13 = arith.constant 0 : index
    %18 = vector.load %arg2[%c96, %c0_13] : memref<104x128xf32, #tpu.memory_space<vmem>>, vector<1x32xf32>
    %cst_14 = arith.constant dense<0.000000e+00> : vector<1x32xf32>
    %19 = tpu.matmul %18, %17, %cst_14 {dimension_numbers = #tpu.dot_dimension_numbers<[1], [0], [0], [1], [0, 0, 1, 1], [], []>} : vector<1x32xf32>, vector<32x32xf32>, vector<1x32xf32> -> vector<1x32xf32>
    %c56 = arith.constant 56 : index
    %c0_15 = arith.constant 0 : index
    %20 = vector.load %arg2[%c56, %c0_15] : memref<104x128xf32, #tpu.memory_space<vmem>>, vector<32x128xf32>
    %c88 = arith.constant 88 : index
    %c0_16 = arith.constant 0 : index
    %21 = vector.load %arg2[%c88, %c0_16] : memref<104x128xf32, #tpu.memory_space<vmem>>, vector<1x128xf32>
    %cst_17 = arith.constant dense<0.000000e+00> : vector<1x128xf32>
    %22 = tpu.matmul %19, %20, %cst_17 {dimension_numbers = #tpu.dot_dimension_numbers<[1], [0], [0], [1], [0, 0, 1, 1], [], []>} : vector<1x32xf32>, vector<32x128xf32>, vector<1x128xf32> -> vector<1x128xf32>
    %23 = arith.addf %22, %21 : vector<1x128xf32>
    %c0_18 = arith.constant 0 : index
    %c0_19 = arith.constant 0 : index
    %24 = vector.load %arg3[%c0_18, %c0_19] : memref<1x128xf32, #tpu.memory_space<vmem>>, vector<1x128xf32>
    tpu.vector_store %arg3[%c0_18, %c0_19], %23 {strides = array<i32>} : memref<1x128xf32, #tpu.memory_space<vmem>>, vector<1x128xf32>,
    return
  }
}

</mosaic_0001>

<llo_original>
// kernel: tpu_custom_call.1
$region0: #{tpu_custom_call.1}
  #allocation0 [shape = 'u32[]', space=smem, size = 0x4, offset = 0x4, fixed_abs, tag = 'smem constant byte address 0x4 - core index']
  #allocation1 [shape = 'u32[144,128]{1,0:T(1,128)}', space=vmem, size = 0x12000, scoped, tag = 'internal scratch']
  %s0 = inlined_call_operand.vmem [shape: f32[32,32], index: 0, kind: input, shape index: {}]
  %s1 = inlined_call_operand.vmem [shape: f32[32,8], index: 1, kind: input, shape index: {}]
  %s2 = inlined_call_operand.hbm [shape: f32[104,128], index: 2, kind: input, shape index: {}]
  %s3 = inlined_call_operand.hbm [shape: f32[1,128], index: 3, kind: output, shape index: {}]
  %s4 = sld [smem:[#allocation0]]
  $region26: #{tpu_custom_call.1} parent=0
    _
  %s6 = ssub.s32 1, %s4
  %s7 = scalar_select 0, %s6, %s4
  $region1: #{tpu_custom_call.1} parent=0
    #allocation2 [shape = 'u8[53248]{0}', space=vmem, size = 0xd000, scoped, tag = 'input window, operand 2, single buffered']
    #allocation3 [shape = 's32[1]{0}', space=sflag, size = 0x4, scoped, tag = 'scoped memory for tpu_custom_call.1']
    #allocation4 [shape = 's32[1]{0}', space=sflag, size = 0x4, scoped, tag = 'scoped memory for tpu_custom_call.1']
    #allocation5 [shape = 'u8[512]{0}', space=vmem, size = 0x400, scoped, tag = 'output window, operand 0, single buffered']
    %8 = vsyncpa [#allocation3], 0
    %9 = vsyncpa [#allocation4], 0
    // Predicated region
    $region2: #{tpu_custom_call.1} parent=1 // pred_check
      _
    $region3: #{tpu_custom_call.1} parent=1 // pred_check_branch
      %11 = sbr.rel (0) target = $region5
    $region4: #{tpu_custom_call.1} parent=1 // pred_region
      _
    $region5: #{tpu_custom_call.1} parent=1 // pred_fallthru
      _
    // Predicated region
    $region6: #{tpu_custom_call.1} parent=1 // pred_check
      _
    $region7: #{tpu_custom_call.1} parent=1 // pred_check_branch
      %13 = sbr.rel (0) target = $region9
    $region8: #{tpu_custom_call.1} parent=1 // pred_region
      _
    $region9: #{tpu_custom_call.1} parent=1 // pred_fallthru
      _
    // Predicated region
    $region10: #{tpu_custom_call.1} parent=1 // pred_check
      _
    $region11: #{tpu_custom_call.1} parent=1 // pred_check_branch
      %15 = sbr.rel (0) target = $region13
    $region12: #{tpu_custom_call.1} parent=1 // pred_region
      %s17 = ssub.s32 1664, 1664
      %18 = vsyncadd [#allocation3], %s17
      %s19 = sshll.u32 [#allocation2], 4
      %s20 = int_to_ptr.vmem [resolvable:$true] %s19
      %25 = dma.hbm_to_vmem [thread:$0]  %s2, 1664, %s20, [#allocation3], 128, 128, 8
    $region13: #{tpu_custom_call.1} parent=1 // pred_fallthru
      _
    // Predicated region
    $region14: #{tpu_custom_call.1} parent=1 // pred_check
      _
    $region15: #{tpu_custom_call.1} parent=1 // pred_check_branch
      %27 = sbr.rel (0) target = $region17
    $region16: #{tpu_custom_call.1} parent=1 // pred_region
      %28 = dma.done [#allocation3], 1664
    $region17: #{tpu_custom_call.1} parent=1 // pred_fallthru
      _
    %v29 = vld [vmem:[%s0] sm:$0xff]
    %v30 = vld [vmem:[%s0 + $0x8] sm:$0xff]
    %v31 = vld [vmem:[%s0 + $0x10] sm:$0xff]
    %v32 = vld [vmem:[%s0 + $0x18] sm:$0xff]
    %v33 = vld [vmem:[%s1] sm:$0xff]
    %v34 = vld [vmem:[%s1 + $0x8] sm:$0xff]
    %v35 = vld [vmem:[%s1 + $0x10] sm:$0xff]
    %v36 = vld [vmem:[%s1 + $0x18] sm:$0xff]
    %v37 = vld [vmem:[#allocation2] sm:$0xff]
    %v38 = vld [vmem:[#allocation2 + $0x8] sm:$0x1]
    %vm39 = vcmask 261120
    %v41 = vsel %vm39, %v29, 0
    %v44 = vsel %vm39, %v30, 0
    %v47 = vsel %vm39, %v31, 0
    %v50 = vsel %vm39, %v32, 0
    %52 = vmatprep.subr.mxu0 0.0
    %53 = vmatpush1.msra.mxu0 %v33
    %54 = vmatprep.subr.mxu0 0.0
    %55 = vmatpush1.msra.mxu0 %v34
    %56 = vmatprep.subr.mxu0 0.0
    %57 = vmatpush1.msra.mxu0 %v35
    %58 = vmatprep.subr.mxu0 0.0
    %59 = vmatpush1.msra.mxu0 %v36
    %60 = vmatprep.subr.mxu0 0.0
    %61 = vmatpush1.msra.mxu0 0.0
    %62 = vmatprep.subr.mxu0 0.0
    %63 = vmatpush1.msra.mxu0 0.0
    %64 = vmatprep.subr.mxu0 0.0
    %65 = vmatpush1.msra.mxu0 0.0
    %66 = vmatprep.subr.mxu0 0.0
    %67 = vmatpush1.msra.mxu0 0.0
    %68 = vmatprep.subr.mxu0 0.0
    %69 = vmatpush1.msra.mxu0 0.0
    %70 = vmatprep.subr.mxu0 0.0
    %71 = vmatpush1.msra.mxu0 0.0
    %72 = vmatprep.subr.mxu0 0.0
    %73 = vmatpush1.msra.mxu0 0.0
    %74 = vmatprep.subr.mxu0 0.0
    %75 = vmatpush1.msra.mxu0 0.0
    %76 = vmatprep.subr.mxu0 0.0
    %77 = vmatpush1.msra.mxu0 0.0
    %78 = vmatprep.subr.mxu0 0.0
    %79 = vmatpush1.msra.mxu0 0.0
    %80 = vmatprep.subr.mxu0 0.0
    %81 = vmatpush1.msra.mxu0 0.0
    %82 = vmatprep.subr.mxu0 0.0
    %83 = vmatpush1.msra.mxu0 0.0
    %84 = vmatprep.subr.mxu0 0.0
    %85 = vmatpush1.msra.mxu0 0.0
    %86 = vmatprep.subr.mxu0 0.0
    %87 = vmatpush1.msra.mxu0 0.0
    %88 = vmatprep.subr.mxu0 0.0
    %89 = vmatpush1.msra.mxu0 0.0
    %90 = vmatprep.subr.mxu0 0.0
    %91 = vmatpush1.msra.mxu0 0.0
    %92 = vmatprep.subr.mxu0 0.0
    %93 = vmatpush1.msra.mxu0 0.0
    %94 = vmatprep.subr.mxu0 0.0
    %95 = vmatpush1.msra.mxu0 0.0
    %96 = vmatprep.subr.mxu0 0.0
    %97 = vmatpush1.msra.mxu0 0.0
    %98 = vmatprep.subr.mxu0 0.0
    %99 = vmatpush1.msra.mxu0 0.0
    %100 = vmatprep.subr.mxu0 0.0
    %101 = vmatpush1.msra.mxu0 0.0
    %102 = vmatprep.subr.mxu0 0.0
    %103 = vmatpush1.msra.mxu0 0.0
    %104 = vmatprep.subr.mxu0 0.0
    %105 = vmatpush1.msra.mxu0 0.0
    %106 = vmatprep.subr.mxu0 0.0
    %107 = vmatpush1.msra.mxu0 0.0
    %108 = vmatprep.subr.mxu0 0.0
    %109 = vmatpush1.msra.mxu0 0.0
    %110 = vmatprep.subr.mxu0 0.0
    %111 = vmatpush1.msra.mxu0 0.0
    %112 = vmatprep.subr.mxu0 0.0
    %113 = vmatpush1.msra.mxu0 0.0
    %114 = vmatprep.subr.mxu0 0.0
    %115 = vmatpush1.msra.mxu0 0.0
    %116 = vmatprep.mubr.f32.mxu0 0.0
    %117 = vmatmul.mubr.f32.gmra.mrb[0].mxu0 %v41
    %v118 = vpop.f32.mrb[0].mxu0
    %v119 = vadd.f32 0.0, %v118
    %v120 = vpop.f32.mrb[0].mxu0
    %121 = vmatprep.mubr.f32.mxu0 0.0
    %122 = vmatmul.mubr.f32.gmra.mrb[0].mxu0 %v44
    %v123 = vpop.f32.mrb[0].mxu0
    %v124 = vadd.f32 0.0, %v123
    %v125 = vpop.f32.mrb[0].mxu0
    %126 = vmatprep.mubr.f32.mxu0 0.0
    %127 = vmatmul.mubr.f32.gmra.mrb[0].mxu0 %v47
    %v128 = vpop.f32.mrb[0].mxu0
    %v129 = vadd.f32 0.0, %v128
    %v130 = vpop.f32.mrb[0].mxu0
    %131 = vmatprep.mubr.f32.mxu0 0.0
    %132 = vmatmul.mubr.f32.gmra.mrb[0].mxu0 %v50
    %v133 = vpop.f32.mrb[0].mxu0
    %v134 = vadd.f32 0.0, %v133
    %v135 = vpop.f32.mrb[0].mxu0
    %136 = vdwg.mxu0
    %v137 = vlaneseq
    %v138 = vshrl.u32 %v137, 7
    %v139 = vsub.s32 0, %v138
    %v140 = vrot.slane %v38, %v139
    %vm141 = vcmask 64512
    %v143 = vsel %vm141, %v119, 0
    %v146 = vsel %vm141, %v124, 0
    %v149 = vsel %vm141, %v129, 0
    %v152 = vsel %vm141, %v134, 0
    %154 = vmatprep.subr.mxu0 0.0
    %155 = vmatpush1.msra.mxu0 %v37
    %156 = vmatprep.subr.mxu0 0.0
    %157 = vmatpush1.msra.mxu0 0.0
    %158 = vmatprep.subr.mxu0 0.0
    %159 = vmatpush1.msra.mxu0 0.0
    %160 = vmatprep.subr.mxu0 0.0
    %161 = vmatpush1.msra.mxu0 0.0
    %162 = vmatprep.subr.mxu0 0.0
    %163 = vmatpush1.msra.mxu0 0.0
    %164 = vmatprep.subr.mxu0 0.0
    %165 = vmatpush1.msra.mxu0 0.0
    %166 = vmatprep.subr.mxu0 0.0
    %167 = vmatpush1.msra.mxu0 0.0
    %168 = vmatprep.subr.mxu0 0.0
    %169 = vmatpush1.msra.mxu0 0.0
    %170 = vmatprep.subr.mxu0 0.0
    %171 = vmatpush1.msra.mxu0 0.0
    %172 = vmatprep.subr.mxu0 0.0
    %173 = vmatpush1.msra.mxu0 0.0
    %174 = vmatprep.subr.mxu0 0.0
    %175 = vmatpush1.msra.mxu0 0.0
    %176 = vmatprep.subr.mxu0 0.0
    %177 = vmatpush1.msra.mxu0 0.0
    %178 = vmatprep.subr.mxu0 0.0
    %179 = vmatpush1.msra.mxu0 0.0
    %180 = vmatprep.subr.mxu0 0.0
    %181 = vmatpush1.msra.mxu0 0.0
    %182 = vmatprep.subr.mxu0 0.0
    %183 = vmatpush1.msra.mxu0 0.0
    %184 = vmatprep.subr.mxu0 0.0
    %185 = vmatpush1.msra.mxu0 0.0
    %186 = vmatprep.subr.mxu0 0.0
    %187 = vmatpush1.msra.mxu0 0.0
    %188 = vmatprep.subr.mxu0 0.0
    %189 = vmatpush1.msra.mxu0 0.0
    %190 = vmatprep.subr.mxu0 0.0
    %191 = vmatpush1.msra.mxu0 0.0
    %192 = vmatprep.subr.mxu0 0.0
    %193 = vmatpush1.msra.mxu0 0.0
    %194 = vmatprep.subr.mxu0 0.0
    %195 = vmatpush1.msra.mxu0 0.0
    %196 = vmatprep.subr.mxu0 0.0
    %197 = vmatpush1.msra.mxu0 0.0
    %198 = vmatprep.subr.mxu0 0.0
    %199 = vmatpush1.msra.mxu0 0.0
    %200 = vmatprep.subr.mxu0 0.0
    %201 = vmatpush1.msra.mxu0 0.0
    %202 = vmatprep.subr.mxu0 0.0
    %203 = vmatpush1.msra.mxu0 0.0
    %204 = vmatprep.subr.mxu0 0.0
    %205 = vmatpush1.msra.mxu0 0.0
    %206 = vmatprep.subr.mxu0 0.0
    %207 = vmatpush1.msra.mxu0 0.0
    %208 = vmatprep.subr.mxu0 0.0
    %209 = vmatpush1.msra.mxu0 0.0
    %210 = vmatprep.subr.mxu0 0.0
    %211 = vmatpush1.msra.mxu0 0.0
    %212 = vmatprep.subr.mxu0 0.0
    %213 = vmatpush1.msra.mxu0 0.0
    %214 = vmatprep.subr.mxu0 0.0
    %215 = vmatpush1.msra.mxu0 0.0
    %216 = vmatprep.subr.mxu0 0.0
    %217 = vmatpush1.msra.mxu0 0.0
    %218 = vmatprep.mubr.f32.mxu0 0.0
    %219 = vmatmul.mubr.f32.gmra.mrb[0].mxu0 %v143
    %v220 = vpop.f32.mrb[0].mxu0
    %v221 = vadd.f32 %v140, %v220
    %v222 = vpop.f32.mrb[0].mxu0
    %223 = vmatprep.mubr.f32.mxu0 0.0
    %224 = vmatmul.mubr.f32.gmra.mrb[0].mxu0 %v146
    %v225 = vpop.f32.mrb[0].mxu0
    %v226 = vadd.f32 %v140, %v225
    %v227 = vpop.f32.mrb[0].mxu0
    %228 = vmatprep.mubr.f32.mxu0 0.0
    %229 = vmatmul.mubr.f32.gmra.mrb[0].mxu0 %v149
    %v230 = vpop.f32.mrb[0].mxu0
    %v231 = vadd.f32 %v140, %v230
    %v232 = vpop.f32.mrb[0].mxu0
    %233 = vmatprep.mubr.f32.mxu0 0.0
    %234 = vmatmul.mubr.f32.gmra.mrb[0].mxu0 %v152
    %v235 = vpop.f32.mrb[0].mxu0
    %v236 = vadd.f32 %v140, %v235
    %v237 = vpop.f32.mrb[0].mxu0
    %238 = vdwg.mxu0
    %v239 = vmax.f32 %v221, 0.0
    %v240 = vmax.f32 %v226, 0.0
    %v241 = vmax.f32 %v231, 0.0
    %v242 = vmax.f32 %v236, 0.0
    %v243 = vld [vmem:[#allocation2 + $0x10] sm:$0xff]
    %v244 = vld [vmem:[#allocation2 + $0x18] sm:$0xff]
    %v245 = vld [vmem:[#allocation2 + $0x20] sm:$0xff]
    %v246 = vld [vmem:[#allocation2 + $0x28] sm:$0xff]
    %v247 = vld [vmem:[#allocation2 + $0x30] sm:$0x1]
    %v249 = vsel %vm39, %v239, 0
    %v252 = vsel %vm39, %v240, 0
    %v255 = vsel %vm39, %v241, 0
    %v258 = vsel %vm39, %v242, 0
    %260 = vmatprep.subr.mxu0 0.0
    %261 = vmatpush1.msra.mxu0 %v243
    %262 = vmatprep.subr.mxu0 0.0
    %263 = vmatpush1.msra.mxu0 %v244
    %264 = vmatprep.subr.mxu0 0.0
    %265 = vmatpush1.msra.mxu0 %v245
    %266 = vmatprep.subr.mxu0 0.0
    %267 = vmatpush1.msra.mxu0 %v246
    %268 = vmatprep.subr.mxu0 0.0
    %269 = vmatpush1.msra.mxu0 0.0
    %270 = vmatprep.subr.mxu0 0.0
    %271 = vmatpush1.msra.mxu0 0.0
    %272 = vmatprep.subr.mxu0 0.0
    %273 = vmatpush1.msra.mxu0 0.0
    %274 = vmatprep.subr.mxu0 0.0
    %275 = vmatpush1.msra.mxu0 0.0
    %276 = vmatprep.subr.mxu0 0.0
    %277 = vmatpush1.msra.mxu0 0.0
    %278 = vmatprep.subr.mxu0 0.0
    %279 = vmatpush1.msra.mxu0 0.0
    %280 = vmatprep.subr.mxu0 0.0
    %281 = vmatpush1.msra.mxu0 0.0
    %282 = vmatprep.subr.mxu0 0.0
    %283 = vmatpush1.msra.mxu0 0.0
    %284 = vmatprep.subr.mxu0 0.0
    %285 = vmatpush1.msra.mxu0 0.0
    %286 = vmatprep.subr.mxu0 0.0
    %287 = vmatpush1.msra.mxu0 0.0
    %288 = vmatprep.subr.mxu0 0.0
    %289 = vmatpush1.msra.mxu0 0.0
    %290 = vmatprep.subr.mxu0 0.0
    %291 = vmatpush1.msra.mxu0 0.0
    %292 = vmatprep.subr.mxu0 0.0
    %293 = vmatpush1.msra.mxu0 0.0
    %294 = vmatprep.subr.mxu0 0.0
    %295 = vmatpush1.msra.mxu0 0.0
    %296 = vmatprep.subr.mxu0 0.0
    %297 = vmatpush1.msra.mxu0 0.0
    %298 = vmatprep.subr.mxu0 0.0
    %299 = vmatpush1.msra.mxu0 0.0
    %300 = vmatprep.subr.mxu0 0.0
    %301 = vmatpush1.msra.mxu0 0.0
    %302 = vmatprep.subr.mxu0 0.0
    %303 = vmatpush1.msra.mxu0 0.0
    %304 = vmatprep.subr.mxu0 0.0
    %305 = vmatpush1.msra.mxu0 0.0
    %306 = vmatprep.subr.mxu0 0.0
    %307 = vmatpush1.msra.mxu0 0.0
    %308 = vmatprep.subr.mxu0 0.0
    %309 = vmatpush1.msra.mxu0 0.0
    %310 = vmatprep.subr.mxu0 0.0
    %311 = vmatpush1.msra.mxu0 0.0
    %312 = vmatprep.subr.mxu0 0.0
    %313 = vmatpush1.msra.mxu0 0.0
    %314 = vmatprep.subr.mxu0 0.0
    %315 = vmatpush1.msra.mxu0 0.0
    %316 = vmatprep.subr.mxu0 0.0
    %317 = vmatpush1.msra.mxu0 0.0
    %318 = vmatprep.subr.mxu0 0.0
    %319 = vmatpush1.msra.mxu0 0.0
    %320 = vmatprep.subr.mxu0 0.0
    %321 = vmatpush1.msra.mxu0 0.0
    %322 = vmatprep.subr.mxu0 0.0
    %323 = vmatpush1.msra.mxu0 0.0
    %324 = vmatprep.mubr.f32.mxu0 0.0
    %325 = vmatmul.mubr.f32.gmra.mrb[0].mxu0 %v249
    %v326 = vpop.f32.mrb[0].mxu0
    %v327 = vadd.f32 0.0, %v326
    %v328 = vpop.f32.mrb[0].mxu0
    %329 = vmatprep.mubr.f32.mxu0 0.0
    %330 = vmatmul.mubr.f32.gmra.mrb[0].mxu0 %v252
    %v331 = vpop.f32.mrb[0].mxu0
    %v332 = vadd.f32 0.0, %v331
    %v333 = vpop.f32.mrb[0].mxu0
    %334 = vmatprep.mubr.f32.mxu0 0.0
    %335 = vmatmul.mubr.f32.gmra.mrb[0].mxu0 %v255
    %v336 = vpop.f32.mrb[0].mxu0
    %v337 = vadd.f32 0.0, %v336
    %v338 = vpop.f32.mrb[0].mxu0
    %339 = vmatprep.mubr.f32.mxu0 0.0
    %340 = vmatmul.mubr.f32.gmra.mrb[0].mxu0 %v258
    %v341 = vpop.f32.mrb[0].mxu0
    %v342 = vadd.f32 0.0, %v341
    %v343 = vpop.f32.mrb[0].mxu0
    %344 = vdwg.mxu0
    %v345 = vlaneseq
    %v346 = vshrl.u32 %v345, 7
    %v347 = vsub.s32 0, %v346
    %v348 = vrot.slane %v247, %v347
    %349 = vmatprep.subr.mxu0 0.0
    %350 = vmatpush1.msra.mxu0 %v327
    %351 = vmatprep.subr.mxu0 0.0
    %352 = vmatpush1.msra.mxu0 %v332
    %353 = vmatprep.subr.mxu0 0.0
    %354 = vmatpush1.msra.mxu0 %v337
    %355 = vmatprep.subr.mxu0 0.0
    %356 = vmatpush1.msra.mxu0 %v342
    %357 = vmatprep.subr.mxu0 0.0
    %358 = vmatpush1.msra.mxu0 0.0
    %359 = vmatprep.subr.mxu0 0.0
    %360 = vmatpush1.msra.mxu0 0.0
    %361 = vmatprep.subr.mxu0 0.0
    %362 = vmatpush1.msra.mxu0 0.0
    %363 = vmatprep.subr.mxu0 0.0
    %364 = vmatpush1.msra.mxu0 0.0
    %365 = vmatprep.subr.mxu0 0.0
    %366 = vmatpush1.msra.mxu0 0.0
    %367 = vmatprep.subr.mxu0 0.0
    %368 = vmatpush1.msra.mxu0 0.0
    %369 = vmatprep.subr.mxu0 0.0
    %370 = vmatpush1.msra.mxu0 0.0
    %371 = vmatprep.subr.mxu0 0.0
    %372 = vmatpush1.msra.mxu0 0.0
    %373 = vmatprep.subr.mxu0 0.0
    %374 = vmatpush1.msra.mxu0 0.0
    %375 = vmatprep.subr.mxu0 0.0
    %376 = vmatpush1.msra.mxu0 0.0
    %377 = vmatprep.subr.mxu0 0.0
    %378 = vmatpush1.msra.mxu0 0.0
    %379 = vmatprep.subr.mxu0 0.0
    %380 = vmatpush1.msra.mxu0 0.0
    %381 = vmatprep.subr.mxu0 0.0
    %382 = vmatpush1.msra.mxu0 0.0
    %383 = vmatprep.subr.mxu0 0.0
    %384 = vmatpush1.msra.mxu0 0.0
    %385 = vmatprep.subr.mxu0 0.0
    %386 = vmatpush1.msra.mxu0 0.0
    %387 = vmatprep.subr.mxu0 0.0
    %388 = vmatpush1.msra.mxu0 0.0
    %389 = vmatprep.subr.mxu0 0.0
    %390 = vmatpush1.msra.mxu0 0.0
    %391 = vmatprep.subr.mxu0 0.0
    %392 = vmatpush1.msra.mxu0 0.0
    %393 = vmatprep.subr.mxu0 0.0
    %394 = vmatpush1.msra.mxu0 0.0
    %395 = vmatprep.subr.mxu0 0.0
    %396 = vmatpush1.msra.mxu0 0.0
    %397 = vmatprep.subr.mxu0 0.0
    %398 = vmatpush1.msra.mxu0 0.0
    %399 = vmatprep.subr.mxu0 0.0
    %400 = vmatpush1.msra.mxu0 0.0
    %401 = vmatprep.subr.mxu0 0.0
    %402 = vmatpush1.msra.mxu0 0.0
    %403 = vmatprep.subr.mxu0 0.0
    %404 = vmatpush1.msra.mxu0 0.0
    %405 = vmatprep.subr.mxu0 0.0
    %406 = vmatpush1.msra.mxu0 0.0
    %407 = vmatprep.subr.mxu0 0.0
    %408 = vmatpush1.msra.mxu0 0.0
    %409 = vmatprep.subr.mxu0 0.0
    %410 = vmatpush1.msra.mxu0 0.0
    %411 = vmatprep.subr.mxu0 0.0
    %412 = vmatpush1.msra.mxu0 0.0
    %413 = vmatprep.mubr.f32.mxu0 0.0
    %414 = vmatmul.mubr.f32.gmra.mrb[0].mxu0 %v41
    %v415 = vpop.f32.mrb[0].mxu0
    %v416 = vadd.f32 %v348, %v415
    %v417 = vpop.f32.mrb[0].mxu0
    %418 = vmatprep.mubr.f32.mxu0 0.0
    %419 = vmatmul.mubr.f32.gmra.mrb[0].mxu0 %v44
    %v420 = vpop.f32.mrb[0].mxu0
    %v421 = vadd.f32 %v348, %v420
    %v422 = vpop.f32.mrb[0].mxu0
    %423 = vmatprep.mubr.f32.mxu0 0.0
    %424 = vmatmul.mubr.f32.gmra.mrb[0].mxu0 %v47
    %v425 = vpop.f32.mrb[0].mxu0
    %v426 = vadd.f32 %v348, %v425
    %v427 = vpop.f32.mrb[0].mxu0
    %428 = vmatprep.mubr.f32.mxu0 0.0
    %429 = vmatmul.mubr.f32.gmra.mrb[0].mxu0 %v50
    %v430 = vpop.f32.mrb[0].mxu0
    %v431 = vadd.f32 %v348, %v430
    %v432 = vpop.f32.mrb[0].mxu0
    %433 = vdwg.mxu0
    %v434 = vmax.f32 %v416, 0.0
    %v435 = vmax.f32 %v421, 0.0
    %v436 = vmax.f32 %v426, 0.0
    %v437 = vmax.f32 %v431, 0.0
    %v438 = vld [vmem:[#allocation2 + $0x60] sm:$0x1]
    %v440 = vsel %vm39, %v438, 0
    %442 = vmatprep.subr.mxu0 0.0
    %443 = vmatpush1.msra.mxu0 %v434
    %444 = vmatprep.subr.mxu0 0.0
    %445 = vmatpush1.msra.mxu0 %v435
    %446 = vmatprep.subr.mxu0 0.0
    %447 = vmatpush1.msra.mxu0 %v436
    %448 = vmatprep.subr.mxu0 0.0
    %449 = vmatpush1.msra.mxu0 %v437
    %450 = vmatprep.subr.mxu0 0.0
    %451 = vmatpush1.msra.mxu0 0.0
    %452 = vmatprep.subr.mxu0 0.0
    %453 = vmatpush1.msra.mxu0 0.0
    %454 = vmatprep.subr.mxu0 0.0
    %455 = vmatpush1.msra.mxu0 0.0
    %456 = vmatprep.subr.mxu0 0.0
    %457 = vmatpush1.msra.mxu0 0.0
    %458 = vmatprep.subr.mxu0 0.0
    %459 = vmatpush1.msra.mxu0 0.0
    %460 = vmatprep.subr.mxu0 0.0
    %461 = vmatpush1.msra.mxu0 0.0
    %462 = vmatprep.subr.mxu0 0.0
    %463 = vmatpush1.msra.mxu0 0.0
    %464 = vmatprep.subr.mxu0 0.0
    %465 = vmatpush1.msra.mxu0 0.0
    %466 = vmatprep.subr.mxu0 0.0
    %467 = vmatpush1.msra.mxu0 0.0
    %468 = vmatprep.subr.mxu0 0.0
    %469 = vmatpush1.msra.mxu0 0.0
    %470 = vmatprep.subr.mxu0 0.0
    %471 = vmatpush1.msra.mxu0 0.0
    %472 = vmatprep.subr.mxu0 0.0
    %473 = vmatpush1.msra.mxu0 0.0
    %474 = vmatprep.subr.mxu0 0.0
    %475 = vmatpush1.msra.mxu0 0.0
    %476 = vmatprep.subr.mxu0 0.0
    %477 = vmatpush1.msra.mxu0 0.0
    %478 = vmatprep.subr.mxu0 0.0
    %479 = vmatpush1.msra.mxu0 0.0
    %480 = vmatprep.subr.mxu0 0.0
    %481 = vmatpush1.msra.mxu0 0.0
    %482 = vmatprep.subr.mxu0 0.0
    %483 = vmatpush1.msra.mxu0 0.0
    %484 = vmatprep.subr.mxu0 0.0
    %485 = vmatpush1.msra.mxu0 0.0
    %486 = vmatprep.subr.mxu0 0.0
    %487 = vmatpush1.msra.mxu0 0.0
    %488 = vmatprep.subr.mxu0 0.0
    %489 = vmatpush1.msra.mxu0 0.0
    %490 = vmatprep.subr.mxu0 0.0
    %491 = vmatpush1.msra.mxu0 0.0
    %492 = vmatprep.subr.mxu0 0.0
    %493 = vmatpush1.msra.mxu0 0.0
    %494 = vmatprep.subr.mxu0 0.0
    %495 = vmatpush1.msra.mxu0 0.0
    %496 = vmatprep.subr.mxu0 0.0
    %497 = vmatpush1.msra.mxu0 0.0
    %498 = vmatprep.subr.mxu0 0.0
    %499 = vmatpush1.msra.mxu0 0.0
    %500 = vmatprep.subr.mxu0 0.0
    %501 = vmatpush1.msra.mxu0 0.0
    %502 = vmatprep.subr.mxu0 0.0
    %503 = vmatpush1.msra.mxu0 0.0
    %504 = vmatprep.subr.mxu0 0.0
    %505 = vmatpush1.msra.mxu0 0.0
    %506 = vmatprep.mubr.f32.mxu0 0.0
    %507 = vmatmul.mubr.f32.gmra.mrb[0].mxu0 %v440
    %v508 = vpop.f32.mrb[0].mxu0
    %v509 = vadd.f32 0.0, %v508
    %v510 = vpop.f32.mrb[0].mxu0
    %511 = vdwg.mxu0
    %v512 = vld [vmem:[#allocation2 + $0x38] sm:$0xff]
    %v513 = vld [vmem:[#allocation2 + $0x40] sm:$0xff]
    %v514 = vld [vmem:[#allocation2 + $0x48] sm:$0xff]
    %v515 = vld [vmem:[#allocation2 + $0x50] sm:$0xff]
    %v516 = vld [vmem:[#allocation2 + $0x58] sm:$0x1]
    %v518 = vsel %vm39, %v509, 0
    %520 = vmatprep.subr.mxu0 0.0
    %521 = vmatpush1.msra.mxu0 %v512
    %522 = vmatprep.subr.mxu0 0.0
    %523 = vmatpush1.msra.mxu0 %v513
    %524 = vmatprep.subr.mxu0 0.0
    %525 = vmatpush1.msra.mxu0 %v514
    %526 = vmatprep.subr.mxu0 0.0
    %527 = vmatpush1.msra.mxu0 %v515
    %528 = vmatprep.subr.mxu0 0.0
    %529 = vmatpush1.msra.mxu0 0.0
    %530 = vmatprep.subr.mxu0 0.0
    %531 = vmatpush1.msra.mxu0 0.0
    %532 = vmatprep.subr.mxu0 0.0
    %533 = vmatpush1.msra.mxu0 0.0
    %534 = vmatprep.subr.mxu0 0.0
    %535 = vmatpush1.msra.mxu0 0.0
    %536 = vmatprep.subr.mxu0 0.0
    %537 = vmatpush1.msra.mxu0 0.0
    %538 = vmatprep.subr.mxu0 0.0
    %539 = vmatpush1.msra.mxu0 0.0
    %540 = vmatprep.subr.mxu0 0.0
    %541 = vmatpush1.msra.mxu0 0.0
    %542 = vmatprep.subr.mxu0 0.0
    %543 = vmatpush1.msra.mxu0 0.0
    %544 = vmatprep.subr.mxu0 0.0
    %545 = vmatpush1.msra.mxu0 0.0
    %546 = vmatprep.subr.mxu0 0.0
    %547 = vmatpush1.msra.mxu0 0.0
    %548 = vmatprep.subr.mxu0 0.0
    %549 = vmatpush1.msra.mxu0 0.0
    %550 = vmatprep.subr.mxu0 0.0
    %551 = vmatpush1.msra.mxu0 0.0
    %552 = vmatprep.subr.mxu0 0.0
    %553 = vmatpush1.msra.mxu0 0.0
    %554 = vmatprep.subr.mxu0 0.0
    %555 = vmatpush1.msra.mxu0 0.0
    %556 = vmatprep.subr.mxu0 0.0
    %557 = vmatpush1.msra.mxu0 0.0
    %558 = vmatprep.subr.mxu0 0.0
    %559 = vmatpush1.msra.mxu0 0.0
    %560 = vmatprep.subr.mxu0 0.0
    %561 = vmatpush1.msra.mxu0 0.0
    %562 = vmatprep.subr.mxu0 0.0
    %563 = vmatpush1.msra.mxu0 0.0
    %564 = vmatprep.subr.mxu0 0.0
    %565 = vmatpush1.msra.mxu0 0.0
    %566 = vmatprep.subr.mxu0 0.0
    %567 = vmatpush1.msra.mxu0 0.0
    %568 = vmatprep.subr.mxu0 0.0
    %569 = vmatpush1.msra.mxu0 0.0
    %570 = vmatprep.subr.mxu0 0.0
    %571 = vmatpush1.msra.mxu0 0.0
    %572 = vmatprep.subr.mxu0 0.0
    %573 = vmatpush1.msra.mxu0 0.0
    %574 = vmatprep.subr.mxu0 0.0
    %575 = vmatpush1.msra.mxu0 0.0
    %576 = vmatprep.subr.mxu0 0.0
    %577 = vmatpush1.msra.mxu0 0.0
    %578 = vmatprep.subr.mxu0 0.0
    %579 = vmatpush1.msra.mxu0 0.0
    %580 = vmatprep.subr.mxu0 0.0
    %581 = vmatpush1.msra.mxu0 0.0
    %582 = vmatprep.subr.mxu0 0.0
    %583 = vmatpush1.msra.mxu0 0.0
    %584 = vmatprep.mubr.f32.mxu0 0.0
    %585 = vmatmul.mubr.f32.gmra.mrb[0].mxu0 %v518
    %v586 = vpop.f32.mrb[0].mxu0
    %v587 = vadd.f32 %v516, %v586
    %v588 = vpop.f32.mrb[0].mxu0
    %589 = vdwg.mxu0
    %590 = vst [vmem:[#allocation5] sm:$0x1] %v587
    // Predicated region
    $region18: #{tpu_custom_call.1} parent=1 // pred_check
      _
    $region19: #{tpu_custom_call.1} parent=1 // pred_check_branch
      %592 = sbr.rel (0) target = $region21
    $region20: #{tpu_custom_call.1} parent=1 // pred_region
      %s594 = ssub.s32 16, 16
      %595 = vsyncadd [#allocation4], %s594
      %s597 = sshll.u32 [#allocation5], 4
      %s598 = int_to_ptr.vmem [resolvable:$true] %s597
      %600 = dma.vmem_to_hbm [thread:$0]  %s598, 16, %s3, [#allocation4]
    $region21: #{tpu_custom_call.1} parent=1 // pred_fallthru
      _
    // Predicated region
    $region22: #{tpu_custom_call.1} parent=1 // pred_check
      _
    $region23: #{tpu_custom_call.1} parent=1 // pred_check_branch
      %602 = sbr.rel (0) target = $region25
    $region24: #{tpu_custom_call.1} parent=1 // pred_region
      %603 = dma.done [#allocation4], 16
    $region25: #{tpu_custom_call.1} parent=1 // pred_fallthru
      _
    %604 = vsyncpa [#allocation3], 1
    %605 = vsyncpa [#allocation4], 1

</llo_original>
